<compile_context>
chip_gen: v7x
topology: tpu7x:2x2x1
jax: 0.10.0
libtpu: 0.0.40
codegen_flags: <defaults>
</compile_context>

<pallas_src>
import jax
import jax.numpy as jnp
from jax import lax
from jax.experimental import pallas as pl
from jax.experimental.pallas import tpu as pltpu


# A @ B^T contraction (same dimension_numbers the TPU flash-attention kernel uses).
_TRANS_B_DIM_NUMBERS = (((1,), (1,)), ((), ()))


# ----------------------------------------------------------------------------
# Kernel
# ----------------------------------------------------------------------------
def _qnet_kernel(xa_ref, p_ref, wc_ref, out_ref):
    # xa_ref : (TILE_B, 4)   concat([x, a], axis=1) tile
    # p_ref  : (8, 128)      packed slab (see pack_qnet_params)
    # wc_ref : (128, 32)     fc_cat weight, pre-transposed
    # out_ref: (1, TILE_B)   lane-dense output row (batch along lanes)
    xa = xa_ref[...]                                    # (TB, 4)

    w_in = p_ref[0:4, :]                                # (4, 128)  block-diag [Ws|0 ; 0|Wa]
    b_in = p_ref[4:5, :]                                # (1, 128)  [bs | ba]
    bc   = p_ref[5:6, 0:32]                             # (1, 32)
    wo   = p_ref[6:7, 0:32]                             # (1, 32)
    bo   = p_ref[7:8, 0:1]                              # (1, 1)

    # fused fc_s + fc_a  (one MXU push, K=4 -> N=128), ReLU once.
    h = jnp.dot(xa, w_in, preferred_element_type=jnp.float32) + b_in
    h = jnp.maximum(h, 0.0)                             # (TB, 128) == concat([h1, h2])

    # fc_cat: clean 128-deep contraction on the MXU.
    q = jnp.dot(h, wc_ref[...], preferred_element_type=jnp.float32) + bc
    q = jnp.maximum(q, 0.0)                             # (TB, 32)

    # fc_out: trans_b MXU dot -> (1, TB) lane-dense row (unmasked full-lane store).
    out = lax.dot_general(wo, q, _TRANS_B_DIM_NUMBERS,
                          preferred_element_type=jnp.float32) + bo  # (1, TB)
    out_ref[...] = out.astype(out_ref.dtype)


# ----------------------------------------------------------------------------
# Wrapper
# ----------------------------------------------------------------------------
def _round_up(n, m):
    return ((n + m - 1) // m) * m


def qnet_forward(x, a, packed, *, tile_b=512):
    """x: (B, 3), a: (B, 1); returns (B, 1)."""
    slab, wc_t = packed
    B = x.shape[0]

    # Fold the concat into the wrapper: (B, 4) input, block-diagonal weight in-kernel.
    xa = jnp.concatenate([x.astype(jnp.float32), a.astype(jnp.float32)], axis=1)

    # Lane-dense output needs the batch tile to be a multiple of 128.
    tb = min(_round_up(tile_b, 128), _round_up(B, 128))
    b_pad = _round_up(B, tb)
    if b_pad != B:
        xa = jnp.pad(xa, ((0, b_pad - B), (0, 0)))

    grid = (b_pad // tb,)
    out = pl.pallas_call(
        _qnet_kernel,
        out_shape=jax.ShapeDtypeStruct((1, b_pad), jnp.float32),
        grid=grid,
        in_specs=[
            pl.BlockSpec((tb, 4), lambda i: (i, 0)),      # xa tile (streams over batch)
            pl.BlockSpec((8, 128), lambda i: (0, 0)),     # packed slab (resident)
            pl.BlockSpec((128, 32), lambda i: (0, 0)),    # fc_cat weight (resident)
        ],
        out_specs=pl.BlockSpec((1, tb), lambda i: (0, i)),  # lane-dense row slab
        compiler_params=pltpu.CompilerParams(
            dimension_semantics=("parallel",),            # v7x: shard batch across TCs
        ),
    )(xa, slab, wc_t)
    return out[0, :B].reshape(B, 1)


# ----------------------------------------------------------------------------
# Parameters: PyTorch-style init + packing into 2 contiguous buffers
# ----------------------------------------------------------------------------
def init_qnet_params(key):
    """Mimics nn.Linear init: uniform(-1/sqrt(fan_in), +1/sqrt(fan_in))."""
    def linear(k, fan_in, fan_out):
        kw, kb = jax.random.split(k)
        bound = 1.0 / (fan_in ** 0.5)
        w = jax.random.uniform(kw, (fan_out, fan_in), jnp.float32, -bound, bound)
        b = jax.random.uniform(kb, (fan_out,), jnp.float32, -bound, bound)
        return w, b

    k1, k2, k3, k4 = jax.random.split(key, 4)
    ws, bs = linear(k1, 3, 64)       # fc_s
    wa, ba = linear(k2, 1, 64)       # fc_a
    wc, bc = linear(k3, 128, 32)     # fc_cat
    wo, bo = linear(k4, 32, 1)       # fc_out
    return ws, bs, wa, ba, wc, bc, wo, bo


def pack_qnet_params(raw):
    """Pack 8 small arrays into one (8,128) slab + one (128,32) weight."""
    ws, bs, wa, ba, wc, bc, wo, bo = raw

    slab = jnp.zeros((8, 128), jnp.float32)
    # rows 0..3: block-diagonal [x|a] -> hidden weight  [[Ws^T, 0], [0, Wa^T]]
    slab = slab.at[0:3, 0:64].set(ws.T)          # (3, 64)
    slab = slab.at[3:4, 64:128].set(wa.T)        # (1, 64)
    # row 4: fused bias [bs | ba]
    slab = slab.at[4, 0:64].set(bs)
    slab = slab.at[4, 64:128].set(ba)
    # row 5: fc_cat bias, row 6: fc_out weight row, row 7 lane 0: fc_out bias
    slab = slab.at[5, 0:32].set(bc)
    slab = slab.at[6, 0:32].set(wo[0])
    slab = slab.at[7, 0].set(bo[0])

    wc_t = wc.T                                  # (128, 32)
    return slab, wc_t


# ----------------------------------------------------------------------------
# Pure-JAX reference (unfused, mirrors the PyTorch module)
# ----------------------------------------------------------------------------
def _reference_forward(x, a, raw):
    ws, bs, wa, ba, wc, bc, wo, bo = raw
    h1 = jnp.maximum(x @ ws.T + bs, 0.0)
    h2 = jnp.maximum(a @ wa.T + ba, 0.0)
    cat = jnp.concatenate([h1, h2], axis=1)
    q = jnp.maximum(cat @ wc.T + bc, 0.0)
    return q @ wo.T + bo


if __name__ == "__main__":
    key = jax.random.PRNGKey(0)
    kp, kx, ka, kx2, ka2 = jax.random.split(key, 5)

    raw = init_qnet_params(kp)
    packed = pack_qnet_params(raw)

    # Small batch (single grid step, padded to one 128-lane tile).
    B = 8
    x = jax.random.normal(kx, (B, 3), jnp.float32)
    a = jax.random.normal(ka, (B, 1), jnp.float32)
    out = jax.block_until_ready(qnet_forward(x, a, packed))
    ref = _reference_forward(x, a, raw)
    assert out.shape == (B, 1)
    assert jnp.allclose(out, ref, atol=1e-4, rtol=1e-4)

    # Larger, non-multiple batch to exercise the grid + padding path (3 steps).
    B2 = 600
    x2 = jax.random.normal(kx2, (B2, 3), jnp.float32)
    a2 = jax.random.normal(ka2, (B2, 1), jnp.float32)
    out2 = jax.block_until_ready(qnet_forward(x2, a2, packed, tile_b=256))
    ref2 = _reference_forward(x2, a2, raw)
    assert out2.shape == (B2, 1)
    assert jnp.allclose(out2, ref2, atol=1e-4, rtol=1e-4)

    # TODO(synk): train_net (Adam + smooth_l1 backward) and soft_update are
    # training utilities, not part of the forward pass, and are not kernelized.
    print("KERNEL_OK")
</pallas_src>

<mosaic_0001>
module attributes {stable_mosaic.version = 11 : i64} {
  func.func @_qnet_kernel(%arg0: i32, %arg1: memref<128x4xf32, #tpu.memory_space<vmem>>, %arg2: memref<8x128xf32, #tpu.memory_space<vmem>>, %arg3: memref<128x32xf32, #tpu.memory_space<vmem>>, %arg4: memref<1x128xf32, #tpu.memory_space<vmem>>) attributes {dimension_semantics = [#tpu.dimension_semantics<parallel>], iteration_bounds = array<i64: 1>, scalar_prefetch = 0 : i64, scratch_operands = 0 : i64, tpu.core_type = #tpu.core_type<tc>, window_params = [{transform_indices = @transform_0, window_bounds = array<i64: 128, 4>}, {pipeline_mode = #tpu.pipeline_mode<synchronous>, transform_indices = @transform_1, window_bounds = array<i64: 8, 128>}, {pipeline_mode = #tpu.pipeline_mode<synchronous>, transform_indices = @transform_2, window_bounds = array<i64: 128, 32>}, {transform_indices = @transform_3, window_bounds = array<i64: 1, 128>}]} {
    %c0 = arith.constant 0 : index
    %c0_0 = arith.constant 0 : index
    %0 = vector.load %arg1[%c0, %c0_0] : memref<128x4xf32, #tpu.memory_space<vmem>>, vector<128x4xf32>
    %c0_1 = arith.constant 0 : index
    %c0_2 = arith.constant 0 : index
    %1 = vector.load %arg2[%c0_1, %c0_2] : memref<8x128xf32, #tpu.memory_space<vmem>>, vector<4x128xf32>
    %c4 = arith.constant 4 : index
    %c0_3 = arith.constant 0 : index
    %2 = vector.load %arg2[%c4, %c0_3] : memref<8x128xf32, #tpu.memory_space<vmem>>, vector<1x128xf32>
    %c5 = arith.constant 5 : index
    %c0_4 = arith.constant 0 : index
    %3 = vector.load %arg2[%c5, %c0_4] : memref<8x128xf32, #tpu.memory_space<vmem>>, vector<1x32xf32>
    %c6 = arith.constant 6 : index
    %c0_5 = arith.constant 0 : index
    %4 = vector.load %arg2[%c6, %c0_5] : memref<8x128xf32, #tpu.memory_space<vmem>>, vector<1x32xf32>
    %c7 = arith.constant 7 : index
    %c0_6 = arith.constant 0 : index
    %5 = vector.load %arg2[%c7, %c0_6] : memref<8x128xf32, #tpu.memory_space<vmem>>, vector<1x1xf32>
    %cst = arith.constant dense<0.000000e+00> : vector<128x128xf32>
    %6 = tpu.matmul %0, %1, %cst {dimension_numbers = #tpu.dot_dimension_numbers<[1], [0], [0], [1], [0, 0, 1, 1], [], []>} : vector<128x4xf32>, vector<4x128xf32>, vector<128x128xf32> -> vector<128x128xf32>
    %7 = vector.broadcast %2 : vector<1x128xf32> to vector<128x128xf32>
    %8 = arith.addf %6, %7 : vector<128x128xf32>
    %cst_7 = arith.constant 0.000000e+00 : f32
    %9 = vector.broadcast %cst_7 : f32 to vector<128x128xf32>
    %10 = arith.maximumf %8, %9 : vector<128x128xf32>
    %c0_8 = arith.constant 0 : index
    %c0_9 = arith.constant 0 : index
    %11 = vector.load %arg3[%c0_8, %c0_9] : memref<128x32xf32, #tpu.memory_space<vmem>>, vector<128x32xf32>
    %cst_10 = arith.constant dense<0.000000e+00> : vector<128x32xf32>
    %12 = tpu.matmul %10, %11, %cst_10 {dimension_numbers = #tpu.dot_dimension_numbers<[1], [0], [0], [1], [0, 0, 1, 1], [], []>} : vector<128x128xf32>, vector<128x32xf32>, vector<128x32xf32> -> vector<128x32xf32>
    %13 = vector.broadcast %3 : vector<1x32xf32> to vector<128x32xf32>
    %14 = arith.addf %12, %13 : vector<128x32xf32>
    %cst_11 = arith.constant 0.000000e+00 : f32
    %15 = vector.broadcast %cst_11 : f32 to vector<128x32xf32>
    %16 = arith.maximumf %14, %15 : vector<128x32xf32>
    %cst_12 = arith.constant dense<0.000000e+00> : vector<1x128xf32>
    %17 = tpu.matmul %4, %16, %cst_12 {dimension_numbers = #tpu.dot_dimension_numbers<[1], [1], [0], [0], [0, 0, 1, 0], [], []>} : vector<1x32xf32>, vector<128x32xf32>, vector<1x128xf32> -> vector<1x128xf32>
    %18 = vector.broadcast %5 : vector<1x1xf32> to vector<1x128xf32>
    %19 = arith.addf %17, %18 : vector<1x128xf32>
    %c0_13 = arith.constant 0 : index
    %c0_14 = arith.constant 0 : index
    %20 = vector.load %arg4[%c0_13, %c0_14] : memref<1x128xf32, #tpu.memory_space<vmem>>, vector<1x128xf32>
    tpu.vector_store %arg4[%c0_13, %c0_14], %19 {strides = array<i32>} : memref<1x128xf32, #tpu.memory_space<vmem>>, vector<1x128xf32>,
    return
  }
  func.func @transform_0(%arg0: i32) -> (i32, i32) {
    %c0_i32 = arith.constant 0 : i32
    %c0_i32_0 = arith.constant 0 : i32
    return %arg0, %c0_i32 : i32, i32
  }
  func.func @transform_1(%arg0: i32) -> (i32, i32) {
    %c0_i32 = arith.constant 0 : i32
    %c0_i32_0 = arith.constant 0 : i32
    %c0_i32_1 = arith.constant 0 : i32
    return %c0_i32, %c0_i32_0 : i32, i32
  }
  func.func @transform_2(%arg0: i32) -> (i32, i32) {
    %c0_i32 = arith.constant 0 : i32
    %c0_i32_0 = arith.constant 0 : i32
    %c0_i32_1 = arith.constant 0 : i32
    return %c0_i32, %c0_i32_0 : i32, i32
  }
  func.func @transform_3(%arg0: i32) -> (i32, i32) {
    %c0_i32 = arith.constant 0 : i32
    %c0_i32_0 = arith.constant 0 : i32
    return %c0_i32, %arg0 : i32, i32
  }
}

</mosaic_0001>

<llo_original>
// kernel: tpu_custom_call.1
$region0: #{tpu_custom_call.1}
  #allocation0 [shape = 'u32[]', space=smem, size = 0x4, offset = 0x4, fixed_abs, tag = 'smem constant byte address 0x4 - core index']
  #allocation1 [shape = 'u32[144,128]{1,0:T(1,128)}', space=vmem, size = 0x12000, scoped, tag = 'internal scratch']
  %s0 = inlined_call_operand.vmem [shape: f32[128,4], index: 0, kind: input, shape index: {}]
  %s1 = inlined_call_operand.vmem [shape: f32[8,128], index: 1, kind: input, shape index: {}]
  %s2 = inlined_call_operand.vmem [shape: f32[128,32], index: 2, kind: input, shape index: {}]
  %s3 = inlined_call_operand.hbm [shape: f32[1,128], index: 3, kind: output, shape index: {}]
  %s4 = sld [smem:[#allocation0]]
  $region22: #{tpu_custom_call.1} parent=0
    _
  %s6 = ssub.s32 1, %s4
  %s7 = scalar_select 0, %s6, %s4
  $region1: #{tpu_custom_call.1} parent=0
    #allocation2 [shape = 'u8[512]{0}', space=vmem, size = 0x400, scoped, tag = 'output window, operand 0, single buffered']
    #allocation3 [shape = 's32[1]{0}', space=sflag, size = 0x4, scoped, tag = 'scoped memory for tpu_custom_call.1']
    %8 = vsyncpa [#allocation3], 0
    // Predicated region
    $region2: #{tpu_custom_call.1} parent=1 // pred_check
      _
    $region3: #{tpu_custom_call.1} parent=1 // pred_check_branch
      %10 = sbr.rel (0) target = $region5
    $region4: #{tpu_custom_call.1} parent=1 // pred_region
      _
    $region5: #{tpu_custom_call.1} parent=1 // pred_fallthru
      _
    // Predicated region
    $region6: #{tpu_custom_call.1} parent=1 // pred_check
      _
    $region7: #{tpu_custom_call.1} parent=1 // pred_check_branch
      %12 = sbr.rel (0) target = $region9
    $region8: #{tpu_custom_call.1} parent=1 // pred_region
      _
    $region9: #{tpu_custom_call.1} parent=1 // pred_fallthru
      _
    // Predicated region
    $region10: #{tpu_custom_call.1} parent=1 // pred_check
      _
    $region11: #{tpu_custom_call.1} parent=1 // pred_check_branch
      %14 = sbr.rel (0) target = $region13
    $region12: #{tpu_custom_call.1} parent=1 // pred_region
      _
    $region13: #{tpu_custom_call.1} parent=1 // pred_fallthru
      _
    %v15 = vld [vmem:[%s0] sm:$0xff]
    %v16 = vld [vmem:[%s0 + $0x8] sm:$0xff]
    %v17 = vld [vmem:[%s0 + $0x10] sm:$0xff]
    %v18 = vld [vmem:[%s0 + $0x18] sm:$0xff]
    %v19 = vld [vmem:[%s0 + $0x20] sm:$0xff]
    %v20 = vld [vmem:[%s0 + $0x28] sm:$0xff]
    %v21 = vld [vmem:[%s0 + $0x30] sm:$0xff]
    %v22 = vld [vmem:[%s0 + $0x38] sm:$0xff]
    %v23 = vld [vmem:[%s0 + $0x40] sm:$0xff]
    %v24 = vld [vmem:[%s0 + $0x48] sm:$0xff]
    %v25 = vld [vmem:[%s0 + $0x50] sm:$0xff]
    %v26 = vld [vmem:[%s0 + $0x58] sm:$0xff]
    %v27 = vld [vmem:[%s0 + $0x60] sm:$0xff]
    %v28 = vld [vmem:[%s0 + $0x68] sm:$0xff]
    %v29 = vld [vmem:[%s0 + $0x70] sm:$0xff]
    %v30 = vld [vmem:[%s0 + $0x78] sm:$0xff]
    %v31 = vld [vmem:[%s1] sm:$0xf]
    %v32 = vld [vmem:[%s1 + $0x4] sm:$0x1]
    %v33 = vld [vmem:[%s1 + $0x5] sm:$0x1]
    %v34 = vld [vmem:[%s1 + $0x6] sm:$0x1]
    %v35 = vld [vmem:[%s1 + $0x7] sm:$0x1]
    %v36 = vlaneseq
    %v37 = vshrl.u32 %v36, 7
    %v38 = vsub.s32 0, %v37
    %v39 = vrot.slane %v32, %v38
    %vm40 = vcmask 31744
    %v42 = vsel %vm40, %v15, 0
    %v45 = vsel %vm40, %v16, 0
    %v48 = vsel %vm40, %v17, 0
    %v51 = vsel %vm40, %v18, 0
    %v54 = vsel %vm40, %v19, 0
    %v57 = vsel %vm40, %v20, 0
    %v60 = vsel %vm40, %v21, 0
    %v63 = vsel %vm40, %v22, 0
    %v66 = vsel %vm40, %v23, 0
    %v69 = vsel %vm40, %v24, 0
    %v72 = vsel %vm40, %v25, 0
    %v75 = vsel %vm40, %v26, 0
    %v78 = vsel %vm40, %v27, 0
    %v81 = vsel %vm40, %v28, 0
    %v84 = vsel %vm40, %v29, 0
    %v87 = vsel %vm40, %v30, 0
    %vm89 = vcmask 1043456
    %v91 = vsel %vm89, %v31, 0
    %93 = vmatprep.subr.mxu0 0.0
    %94 = vmatpush1.msra.mxu0 %v91
    %95 = vmatprep.subr.mxu0 0.0
    %96 = vmatpush1.msra.mxu0 0.0
    %97 = vmatprep.subr.mxu0 0.0
    %98 = vmatpush1.msra.mxu0 0.0
    %99 = vmatprep.subr.mxu0 0.0
    %100 = vmatpush1.msra.mxu0 0.0
    %101 = vmatprep.subr.mxu0 0.0
    %102 = vmatpush1.msra.mxu0 0.0
    %103 = vmatprep.subr.mxu0 0.0
    %104 = vmatpush1.msra.mxu0 0.0
    %105 = vmatprep.subr.mxu0 0.0
    %106 = vmatpush1.msra.mxu0 0.0
    %107 = vmatprep.subr.mxu0 0.0
    %108 = vmatpush1.msra.mxu0 0.0
    %109 = vmatprep.subr.mxu0 0.0
    %110 = vmatpush1.msra.mxu0 0.0
    %111 = vmatprep.subr.mxu0 0.0
    %112 = vmatpush1.msra.mxu0 0.0
    %113 = vmatprep.subr.mxu0 0.0
    %114 = vmatpush1.msra.mxu0 0.0
    %115 = vmatprep.subr.mxu0 0.0
    %116 = vmatpush1.msra.mxu0 0.0
    %117 = vmatprep.subr.mxu0 0.0
    %118 = vmatpush1.msra.mxu0 0.0
    %119 = vmatprep.subr.mxu0 0.0
    %120 = vmatpush1.msra.mxu0 0.0
    %121 = vmatprep.subr.mxu0 0.0
    %122 = vmatpush1.msra.mxu0 0.0
    %123 = vmatprep.subr.mxu0 0.0
    %124 = vmatpush1.msra.mxu0 0.0
    %125 = vmatprep.subr.mxu0 0.0
    %126 = vmatpush1.msra.mxu0 0.0
    %127 = vmatprep.subr.mxu0 0.0
    %128 = vmatpush1.msra.mxu0 0.0
    %129 = vmatprep.subr.mxu0 0.0
    %130 = vmatpush1.msra.mxu0 0.0
    %131 = vmatprep.subr.mxu0 0.0
    %132 = vmatpush1.msra.mxu0 0.0
    %133 = vmatprep.subr.mxu0 0.0
    %134 = vmatpush1.msra.mxu0 0.0
    %135 = vmatprep.subr.mxu0 0.0
    %136 = vmatpush1.msra.mxu0 0.0
    %137 = vmatprep.subr.mxu0 0.0
    %138 = vmatpush1.msra.mxu0 0.0
    %139 = vmatprep.subr.mxu0 0.0
    %140 = vmatpush1.msra.mxu0 0.0
    %141 = vmatprep.subr.mxu0 0.0
    %142 = vmatpush1.msra.mxu0 0.0
    %143 = vmatprep.subr.mxu0 0.0
    %144 = vmatpush1.msra.mxu0 0.0
    %145 = vmatprep.subr.mxu0 0.0
    %146 = vmatpush1.msra.mxu0 0.0
    %147 = vmatprep.subr.mxu0 0.0
    %148 = vmatpush1.msra.mxu0 0.0
    %149 = vmatprep.subr.mxu0 0.0
    %150 = vmatpush1.msra.mxu0 0.0
    %151 = vmatprep.subr.mxu0 0.0
    %152 = vmatpush1.msra.mxu0 0.0
    %153 = vmatprep.subr.mxu0 0.0
    %154 = vmatpush1.msra.mxu0 0.0
    %155 = vmatprep.subr.mxu0 0.0
    %156 = vmatpush1.msra.mxu0 0.0
    %157 = vmatprep.mubr.f32.mxu0 0.0
    %158 = vmatmul.mubr.f32.gmra.mrb[0].mxu0 %v42
    %v159 = vpop.f32.mrb[0].mxu0
    %v160 = vadd.f32 %v39, %v159
    %v161 = vpop.f32.mrb[0].mxu0
    %162 = vmatprep.mubr.f32.mxu0 0.0
    %163 = vmatmul.mubr.f32.gmra.mrb[0].mxu0 %v45
    %v164 = vpop.f32.mrb[0].mxu0
    %v165 = vadd.f32 %v39, %v164
    %v166 = vpop.f32.mrb[0].mxu0
    %167 = vmatprep.mubr.f32.mxu0 0.0
    %168 = vmatmul.mubr.f32.gmra.mrb[0].mxu0 %v48
    %v169 = vpop.f32.mrb[0].mxu0
    %v170 = vadd.f32 %v39, %v169
    %v171 = vpop.f32.mrb[0].mxu0
    %172 = vmatprep.mubr.f32.mxu0 0.0
    %173 = vmatmul.mubr.f32.gmra.mrb[0].mxu0 %v51
    %v174 = vpop.f32.mrb[0].mxu0
    %v175 = vadd.f32 %v39, %v174
    %v176 = vpop.f32.mrb[0].mxu0
    %177 = vmatprep.mubr.f32.mxu0 0.0
    %178 = vmatmul.mubr.f32.gmra.mrb[0].mxu0 %v54
    %v179 = vpop.f32.mrb[0].mxu0
    %v180 = vadd.f32 %v39, %v179
    %v181 = vpop.f32.mrb[0].mxu0
    %182 = vmatprep.mubr.f32.mxu0 0.0
    %183 = vmatmul.mubr.f32.gmra.mrb[0].mxu0 %v57
    %v184 = vpop.f32.mrb[0].mxu0
    %v185 = vadd.f32 %v39, %v184
    %v186 = vpop.f32.mrb[0].mxu0
    %187 = vmatprep.mubr.f32.mxu0 0.0
    %188 = vmatmul.mubr.f32.gmra.mrb[0].mxu0 %v60
    %v189 = vpop.f32.mrb[0].mxu0
    %v190 = vadd.f32 %v39, %v189
    %v191 = vpop.f32.mrb[0].mxu0
    %192 = vmatprep.mubr.f32.mxu0 0.0
    %193 = vmatmul.mubr.f32.gmra.mrb[0].mxu0 %v63
    %v194 = vpop.f32.mrb[0].mxu0
    %v195 = vadd.f32 %v39, %v194
    %v196 = vpop.f32.mrb[0].mxu0
    %197 = vmatprep.mubr.f32.mxu0 0.0
    %198 = vmatmul.mubr.f32.gmra.mrb[0].mxu0 %v66
    %v199 = vpop.f32.mrb[0].mxu0
    %v200 = vadd.f32 %v39, %v199
    %v201 = vpop.f32.mrb[0].mxu0
    %202 = vmatprep.mubr.f32.mxu0 0.0
    %203 = vmatmul.mubr.f32.gmra.mrb[0].mxu0 %v69
    %v204 = vpop.f32.mrb[0].mxu0
    %v205 = vadd.f32 %v39, %v204
    %v206 = vpop.f32.mrb[0].mxu0
    %207 = vmatprep.mubr.f32.mxu0 0.0
    %208 = vmatmul.mubr.f32.gmra.mrb[0].mxu0 %v72
    %v209 = vpop.f32.mrb[0].mxu0
    %v210 = vadd.f32 %v39, %v209
    %v211 = vpop.f32.mrb[0].mxu0
    %212 = vmatprep.mubr.f32.mxu0 0.0
    %213 = vmatmul.mubr.f32.gmra.mrb[0].mxu0 %v75
    %v214 = vpop.f32.mrb[0].mxu0
    %v215 = vadd.f32 %v39, %v214
    %v216 = vpop.f32.mrb[0].mxu0
    %217 = vmatprep.mubr.f32.mxu0 0.0
    %218 = vmatmul.mubr.f32.gmra.mrb[0].mxu0 %v78
    %v219 = vpop.f32.mrb[0].mxu0
    %v220 = vadd.f32 %v39, %v219
    %v221 = vpop.f32.mrb[0].mxu0
    %222 = vmatprep.mubr.f32.mxu0 0.0
    %223 = vmatmul.mubr.f32.gmra.mrb[0].mxu0 %v81
    %v224 = vpop.f32.mrb[0].mxu0
    %v225 = vadd.f32 %v39, %v224
    %v226 = vpop.f32.mrb[0].mxu0
    %227 = vmatprep.mubr.f32.mxu0 0.0
    %228 = vmatmul.mubr.f32.gmra.mrb[0].mxu0 %v84
    %v229 = vpop.f32.mrb[0].mxu0
    %v230 = vadd.f32 %v39, %v229
    %v231 = vpop.f32.mrb[0].mxu0
    %232 = vmatprep.mubr.f32.mxu0 0.0
    %233 = vmatmul.mubr.f32.gmra.mrb[0].mxu0 %v87
    %v234 = vpop.f32.mrb[0].mxu0
    %v235 = vadd.f32 %v39, %v234
    %v236 = vpop.f32.mrb[0].mxu0
    %237 = vdwg.mxu0
    %v238 = vmax.f32 %v160, 0.0
    %v239 = vmax.f32 %v165, 0.0
    %v240 = vmax.f32 %v170, 0.0
    %v241 = vmax.f32 %v175, 0.0
    %v242 = vmax.f32 %v180, 0.0
    %v243 = vmax.f32 %v185, 0.0
    %v244 = vmax.f32 %v190, 0.0
    %v245 = vmax.f32 %v195, 0.0
    %v246 = vmax.f32 %v200, 0.0
    %v247 = vmax.f32 %v205, 0.0
    %v248 = vmax.f32 %v210, 0.0
    %v249 = vmax.f32 %v215, 0.0
    %v250 = vmax.f32 %v220, 0.0
    %v251 = vmax.f32 %v225, 0.0
    %v252 = vmax.f32 %v230, 0.0
    %v253 = vmax.f32 %v235, 0.0
    %v254 = vld [vmem:[%s2] sm:$0xff]
    %v255 = vld [vmem:[%s2 + $0x8] sm:$0xff]
    %v256 = vld [vmem:[%s2 + $0x10] sm:$0xff]
    %v257 = vld [vmem:[%s2 + $0x18] sm:$0xff]
    %v258 = vld [vmem:[%s2 + $0x20] sm:$0xff]
    %v259 = vld [vmem:[%s2 + $0x28] sm:$0xff]
    %v260 = vld [vmem:[%s2 + $0x30] sm:$0xff]
    %v261 = vld [vmem:[%s2 + $0x38] sm:$0xff]
    %v262 = vld [vmem:[%s2 + $0x40] sm:$0xff]
    %v263 = vld [vmem:[%s2 + $0x48] sm:$0xff]
    %v264 = vld [vmem:[%s2 + $0x50] sm:$0xff]
    %v265 = vld [vmem:[%s2 + $0x58] sm:$0xff]
    %v266 = vld [vmem:[%s2 + $0x60] sm:$0xff]
    %v267 = vld [vmem:[%s2 + $0x68] sm:$0xff]
    %v268 = vld [vmem:[%s2 + $0x70] sm:$0xff]
    %v269 = vld [vmem:[%s2 + $0x78] sm:$0xff]
    %v270 = vlaneseq
    %v271 = vshrl.u32 %v270, 7
    %v272 = vsub.s32 0, %v271
    %v273 = vrot.slane %v33, %v272
    %274 = vmatprep.subr.mxu0 0.0
    %275 = vmatpush1.msra.mxu0 %v254
    %276 = vmatprep.subr.mxu0 0.0
    %277 = vmatpush1.msra.mxu0 %v255
    %278 = vmatprep.subr.mxu0 0.0
    %279 = vmatpush1.msra.mxu0 %v256
    %280 = vmatprep.subr.mxu0 0.0
    %281 = vmatpush1.msra.mxu0 %v257
    %282 = vmatprep.subr.mxu0 0.0
    %283 = vmatpush1.msra.mxu0 %v258
    %284 = vmatprep.subr.mxu0 0.0
    %285 = vmatpush1.msra.mxu0 %v259
    %286 = vmatprep.subr.mxu0 0.0
    %287 = vmatpush1.msra.mxu0 %v260
    %288 = vmatprep.subr.mxu0 0.0
    %289 = vmatpush1.msra.mxu0 %v261
    %290 = vmatprep.subr.mxu0 0.0
    %291 = vmatpush1.msra.mxu0 %v262
    %292 = vmatprep.subr.mxu0 0.0
    %293 = vmatpush1.msra.mxu0 %v263
    %294 = vmatprep.subr.mxu0 0.0
    %295 = vmatpush1.msra.mxu0 %v264
    %296 = vmatprep.subr.mxu0 0.0
    %297 = vmatpush1.msra.mxu0 %v265
    %298 = vmatprep.subr.mxu0 0.0
    %299 = vmatpush1.msra.mxu0 %v266
    %300 = vmatprep.subr.mxu0 0.0
    %301 = vmatpush1.msra.mxu0 %v267
    %302 = vmatprep.subr.mxu0 0.0
    %303 = vmatpush1.msra.mxu0 %v268
    %304 = vmatprep.subr.mxu0 0.0
    %305 = vmatpush1.msra.mxu0 %v269
    %306 = vmatprep.subr.mxu0 0.0
    %307 = vmatpush1.msra.mxu0 0.0
    %308 = vmatprep.subr.mxu0 0.0
    %309 = vmatpush1.msra.mxu0 0.0
    %310 = vmatprep.subr.mxu0 0.0
    %311 = vmatpush1.msra.mxu0 0.0
    %312 = vmatprep.subr.mxu0 0.0
    %313 = vmatpush1.msra.mxu0 0.0
    %314 = vmatprep.subr.mxu0 0.0
    %315 = vmatpush1.msra.mxu0 0.0
    %316 = vmatprep.subr.mxu0 0.0
    %317 = vmatpush1.msra.mxu0 0.0
    %318 = vmatprep.subr.mxu0 0.0
    %319 = vmatpush1.msra.mxu0 0.0
    %320 = vmatprep.subr.mxu0 0.0
    %321 = vmatpush1.msra.mxu0 0.0
    %322 = vmatprep.subr.mxu0 0.0
    %323 = vmatpush1.msra.mxu0 0.0
    %324 = vmatprep.subr.mxu0 0.0
    %325 = vmatpush1.msra.mxu0 0.0
    %326 = vmatprep.subr.mxu0 0.0
    %327 = vmatpush1.msra.mxu0 0.0
    %328 = vmatprep.subr.mxu0 0.0
    %329 = vmatpush1.msra.mxu0 0.0
    %330 = vmatprep.subr.mxu0 0.0
    %331 = vmatpush1.msra.mxu0 0.0
    %332 = vmatprep.subr.mxu0 0.0
    %333 = vmatpush1.msra.mxu0 0.0
    %334 = vmatprep.subr.mxu0 0.0
    %335 = vmatpush1.msra.mxu0 0.0
    %336 = vmatprep.subr.mxu0 0.0
    %337 = vmatpush1.msra.mxu0 0.0
    %338 = vmatprep.mubr.f32.mxu0 0.0
    %339 = vmatmul.mubr.f32.gmra.mrb[0].mxu0 %v238
    %v340 = vpop.f32.mrb[0].mxu0
    %v341 = vadd.f32 %v273, %v340
    %v342 = vpop.f32.mrb[0].mxu0
    %343 = vmatprep.mubr.f32.mxu0 0.0
    %344 = vmatmul.mubr.f32.gmra.mrb[0].mxu0 %v239
    %v345 = vpop.f32.mrb[0].mxu0
    %v346 = vadd.f32 %v273, %v345
    %v347 = vpop.f32.mrb[0].mxu0
    %348 = vmatprep.mubr.f32.mxu0 0.0
    %349 = vmatmul.mubr.f32.gmra.mrb[0].mxu0 %v240
    %v350 = vpop.f32.mrb[0].mxu0
    %v351 = vadd.f32 %v273, %v350
    %v352 = vpop.f32.mrb[0].mxu0
    %353 = vmatprep.mubr.f32.mxu0 0.0
    %354 = vmatmul.mubr.f32.gmra.mrb[0].mxu0 %v241
    %v355 = vpop.f32.mrb[0].mxu0
    %v356 = vadd.f32 %v273, %v355
    %v357 = vpop.f32.mrb[0].mxu0
    %358 = vmatprep.mubr.f32.mxu0 0.0
    %359 = vmatmul.mubr.f32.gmra.mrb[0].mxu0 %v242
    %v360 = vpop.f32.mrb[0].mxu0
    %v361 = vadd.f32 %v273, %v360
    %v362 = vpop.f32.mrb[0].mxu0
    %363 = vmatprep.mubr.f32.mxu0 0.0
    %364 = vmatmul.mubr.f32.gmra.mrb[0].mxu0 %v243
    %v365 = vpop.f32.mrb[0].mxu0
    %v366 = vadd.f32 %v273, %v365
    %v367 = vpop.f32.mrb[0].mxu0
    %368 = vmatprep.mubr.f32.mxu0 0.0
    %369 = vmatmul.mubr.f32.gmra.mrb[0].mxu0 %v244
    %v370 = vpop.f32.mrb[0].mxu0
    %v371 = vadd.f32 %v273, %v370
    %v372 = vpop.f32.mrb[0].mxu0
    %373 = vmatprep.mubr.f32.mxu0 0.0
    %374 = vmatmul.mubr.f32.gmra.mrb[0].mxu0 %v245
    %v375 = vpop.f32.mrb[0].mxu0
    %v376 = vadd.f32 %v273, %v375
    %v377 = vpop.f32.mrb[0].mxu0
    %378 = vmatprep.mubr.f32.mxu0 0.0
    %379 = vmatmul.mubr.f32.gmra.mrb[0].mxu0 %v246
    %v380 = vpop.f32.mrb[0].mxu0
    %v381 = vadd.f32 %v273, %v380
    %v382 = vpop.f32.mrb[0].mxu0
    %383 = vmatprep.mubr.f32.mxu0 0.0
    %384 = vmatmul.mubr.f32.gmra.mrb[0].mxu0 %v247
    %v385 = vpop.f32.mrb[0].mxu0
    %v386 = vadd.f32 %v273, %v385
    %v387 = vpop.f32.mrb[0].mxu0
    %388 = vmatprep.mubr.f32.mxu0 0.0
    %389 = vmatmul.mubr.f32.gmra.mrb[0].mxu0 %v248
    %v390 = vpop.f32.mrb[0].mxu0
    %v391 = vadd.f32 %v273, %v390
    %v392 = vpop.f32.mrb[0].mxu0
    %393 = vmatprep.mubr.f32.mxu0 0.0
    %394 = vmatmul.mubr.f32.gmra.mrb[0].mxu0 %v249
    %v395 = vpop.f32.mrb[0].mxu0
    %v396 = vadd.f32 %v273, %v395
    %v397 = vpop.f32.mrb[0].mxu0
    %398 = vmatprep.mubr.f32.mxu0 0.0
    %399 = vmatmul.mubr.f32.gmra.mrb[0].mxu0 %v250
    %v400 = vpop.f32.mrb[0].mxu0
    %v401 = vadd.f32 %v273, %v400
    %v402 = vpop.f32.mrb[0].mxu0
    %403 = vmatprep.mubr.f32.mxu0 0.0
    %404 = vmatmul.mubr.f32.gmra.mrb[0].mxu0 %v251
    %v405 = vpop.f32.mrb[0].mxu0
    %v406 = vadd.f32 %v273, %v405
    %v407 = vpop.f32.mrb[0].mxu0
    %408 = vmatprep.mubr.f32.mxu0 0.0
    %409 = vmatmul.mubr.f32.gmra.mrb[0].mxu0 %v252
    %v410 = vpop.f32.mrb[0].mxu0
    %v411 = vadd.f32 %v273, %v410
    %v412 = vpop.f32.mrb[0].mxu0
    %413 = vmatprep.mubr.f32.mxu0 0.0
    %414 = vmatmul.mubr.f32.gmra.mrb[0].mxu0 %v253
    %v415 = vpop.f32.mrb[0].mxu0
    %v416 = vadd.f32 %v273, %v415
    %v417 = vpop.f32.mrb[0].mxu0
    %418 = vdwg.mxu0
    %v419 = vmax.f32 %v341, 0.0
    %v420 = vmax.f32 %v346, 0.0
    %v421 = vmax.f32 %v351, 0.0
    %v422 = vmax.f32 %v356, 0.0
    %v423 = vmax.f32 %v361, 0.0
    %v424 = vmax.f32 %v366, 0.0
    %v425 = vmax.f32 %v371, 0.0
    %v426 = vmax.f32 %v376, 0.0
    %v427 = vmax.f32 %v381, 0.0
    %v428 = vmax.f32 %v386, 0.0
    %v429 = vmax.f32 %v391, 0.0
    %v430 = vmax.f32 %v396, 0.0
    %v431 = vmax.f32 %v401, 0.0
    %v432 = vmax.f32 %v406, 0.0
    %v433 = vmax.f32 %v411, 0.0
    %v434 = vmax.f32 %v416, 0.0
    %436 = vset.pattern.permute.xlu0 0
    %437 = vperm.xlu0 %436, %v35
    %v438 = vpop.permute.xlu0 %437
    %vm440 = vcmask 261120
    %v442 = vsel %vm440, %v34, 0
    %v445 = vsel %vm440, %v419, 0
    %v448 = vsel %vm440, %v420, 0
    %v451 = vsel %vm440, %v421, 0
    %v454 = vsel %vm440, %v422, 0
    %v457 = vsel %vm440, %v423, 0
    %v460 = vsel %vm440, %v424, 0
    %v463 = vsel %vm440, %v425, 0
    %v466 = vsel %vm440, %v426, 0
    %v469 = vsel %vm440, %v427, 0
    %v472 = vsel %vm440, %v428, 0
    %v475 = vsel %vm440, %v429, 0
    %v478 = vsel %vm440, %v430, 0
    %v481 = vsel %vm440, %v431, 0
    %v484 = vsel %vm440, %v432, 0
    %v487 = vsel %vm440, %v433, 0
    %v490 = vsel %vm440, %v434, 0
    %492 = vmatprep.subr.mxu0 0.0
    %493 = vmatpush1.xpose.msra.mxu0 %v445
    %494 = vmatprep.subr.mxu0 0.0
    %495 = vmatpush1.xpose.msra.mxu0 %v448
    %496 = vmatprep.subr.mxu0 0.0
    %497 = vmatpush1.xpose.msra.mxu0 %v451
    %498 = vmatprep.subr.mxu0 0.0
    %499 = vmatpush1.xpose.msra.mxu0 %v454
    %500 = vmatprep.subr.mxu0 0.0
    %501 = vmatpush1.xpose.msra.mxu0 %v457
    %502 = vmatprep.subr.mxu0 0.0
    %503 = vmatpush1.xpose.msra.mxu0 %v460
    %504 = vmatprep.subr.mxu0 0.0
    %505 = vmatpush1.xpose.msra.mxu0 %v463
    %506 = vmatprep.subr.mxu0 0.0
    %507 = vmatpush1.xpose.msra.mxu0 %v466
    %508 = vmatprep.subr.mxu0 0.0
    %509 = vmatpush1.xpose.msra.mxu0 %v469
    %510 = vmatprep.subr.mxu0 0.0
    %511 = vmatpush1.xpose.msra.mxu0 %v472
    %512 = vmatprep.subr.mxu0 0.0
    %513 = vmatpush1.xpose.msra.mxu0 %v475
    %514 = vmatprep.subr.mxu0 0.0
    %515 = vmatpush1.xpose.msra.mxu0 %v478
    %516 = vmatprep.subr.mxu0 0.0
    %517 = vmatpush1.xpose.msra.mxu0 %v481
    %518 = vmatprep.subr.mxu0 0.0
    %519 = vmatpush1.xpose.msra.mxu0 %v484
    %520 = vmatprep.subr.mxu0 0.0
    %521 = vmatpush1.xpose.msra.mxu0 %v487
    %522 = vmatprep.subr.mxu0 0.0
    %523 = vmatpush1.xpose.msra.mxu0 %v490
    %524 = vmatprep.subr.mxu0 0.0
    %525 = vmatpush1.xpose.msra.mxu0 0.0
    %526 = vmatprep.subr.mxu0 0.0
    %527 = vmatpush1.xpose.msra.mxu0 0.0
    %528 = vmatprep.subr.mxu0 0.0
    %529 = vmatpush1.xpose.msra.mxu0 0.0
    %530 = vmatprep.subr.mxu0 0.0
    %531 = vmatpush1.xpose.msra.mxu0 0.0
    %532 = vmatprep.subr.mxu0 0.0
    %533 = vmatpush1.xpose.msra.mxu0 0.0
    %534 = vmatprep.subr.mxu0 0.0
    %535 = vmatpush1.xpose.msra.mxu0 0.0
    %536 = vmatprep.subr.mxu0 0.0
    %537 = vmatpush1.xpose.msra.mxu0 0.0
    %538 = vmatprep.subr.mxu0 0.0
    %539 = vmatpush1.xpose.msra.mxu0 0.0
    %540 = vmatprep.subr.mxu0 0.0
    %541 = vmatpush1.xpose.msra.mxu0 0.0
    %542 = vmatprep.subr.mxu0 0.0
    %543 = vmatpush1.xpose.msra.mxu0 0.0
    %544 = vmatprep.subr.mxu0 0.0
    %545 = vmatpush1.xpose.msra.mxu0 0.0
    %546 = vmatprep.subr.mxu0 0.0
    %547 = vmatpush1.xpose.msra.mxu0 0.0
    %548 = vmatprep.subr.mxu0 0.0
    %549 = vmatpush1.xpose.msra.mxu0 0.0
    %550 = vmatprep.subr.mxu0 0.0
    %551 = vmatpush1.xpose.msra.mxu0 0.0
    %552 = vmatprep.subr.mxu0 0.0
    %553 = vmatpush1.xpose.msra.mxu0 0.0
    %554 = vmatprep.subr.mxu0 0.0
    %555 = vmatpush1.xpose.msra.mxu0 0.0
    %556 = vmatprep.mubr.f32.mxu0 0.0
    %557 = vmatmul.mubr.f32.gmra.mrb[0].mxu0 %v442
    %v558 = vpop.f32.mrb[0].mxu0
    %v559 = vadd.f32 %v438, %v558
    %v560 = vpop.f32.mrb[0].mxu0
    %561 = vdwg.mxu0
    %562 = vst [vmem:[#allocation2] sm:$0x1] %v559
    // Predicated region
    $region14: #{tpu_custom_call.1} parent=1 // pred_check
      _
    $region15: #{tpu_custom_call.1} parent=1 // pred_check_branch
      %564 = sbr.rel (0) target = $region17
    $region16: #{tpu_custom_call.1} parent=1 // pred_region
      %s566 = ssub.s32 16, 16
      %567 = vsyncadd [#allocation3], %s566
      %s569 = sshll.u32 [#allocation2], 4
      %s570 = int_to_ptr.vmem [resolvable:$true] %s569
      %572 = dma.vmem_to_hbm [thread:$0]  %s570, 16, %s3, [#allocation3]
    $region17: #{tpu_custom_call.1} parent=1 // pred_fallthru
      _
    // Predicated region
    $region18: #{tpu_custom_call.1} parent=1 // pred_check
      _
    $region19: #{tpu_custom_call.1} parent=1 // pred_check_branch
      %574 = sbr.rel (0) target = $region21
    $region20: #{tpu_custom_call.1} parent=1 // pred_region
      %575 = dma.done [#allocation3], 16
    $region21: #{tpu_custom_call.1} parent=1 // pred_fallthru
      _
    %576 = vsyncpa [#allocation3], 1

</llo_original>
